<compile_context>
chip_gen: v6e
topology: v6e:2x2x1
jax: 0.10.0
libtpu: 0.0.40
codegen_flags: <defaults>
</compile_context>

<pallas_src>
import jax
import jax.numpy as jnp
from jax.experimental import pallas as pl
from jax.experimental.pallas import tpu as pltpu


def _se_kernel(x_ref, w1_ref, b1_ref, w2_ref, b2_ref, o_ref):
    # x_ref: (Bt, N, C) block of point features for Bt batches.
    x = x_ref[...]
    xf = x.astype(jnp.float32)                       # reductions / math in f32
    inv_n = 1.0 / x_ref.shape[1]
    # Global average pooling over the N points of each batch (sum, then fold 1/N).
    y = jnp.sum(xf, axis=1) * inv_n                  # (Bt, C)
    # fc: Linear(C, H) -> ReLU -> Linear(H, C) -> Sigmoid  (off the critical path)
    h = jnp.dot(y, w1_ref[...], preferred_element_type=jnp.float32) + b1_ref[...]
    h = jnp.maximum(h, 0.0)                          # (Bt, H)
    g = jnp.dot(h, w2_ref[...], preferred_element_type=jnp.float32) + b2_ref[...]
    g = jax.nn.sigmoid(g)                            # (Bt, C)
    # Broadcast-multiply the gate back onto every point of its batch.
    o_ref[...] = (xf * g[:, None, :]).astype(o_ref.dtype)


def _pick_batch_tile(B, N, C, itemsize, max_block_bytes=8 << 20):
    """Batches per grid step: big DMA tiles, but keep >=2 parallel steps (v7x megacore)."""
    per_batch = max(N * C * itemsize, 1)
    bt = max(1, min(B, max_block_bytes // per_batch))
    if B >= 2:
        bt = min(bt, max(1, B // 2))     # leave >=2 grid steps so both TCs get work
    while B % bt != 0:                   # avoid a ragged last block
        bt -= 1
    return bt


def se_layer(x, w1, b1, w2, b2):
    """x: [B, N, C]; w1: [C, H]; b1: [1, H]; w2: [H, C]; b2: [1, C]."""
    B, N, C = x.shape
    H = w1.shape[1]
    itemsize = jnp.dtype(x.dtype).itemsize
    bt = _pick_batch_tile(B, N, C, itemsize)

    # Explicit VMEM budget: x block + out block, each double-buffered, plus
    # (double-buffered) weights and compiler headroom.  Only raise the scoped
    # limit when needed; cap under v7x's 64 MiB physical VMEM.
    block_bytes = bt * N * C * itemsize
    weight_bytes = 4 * (C * H + H + H * C + C)
    needed = 2 * 2 * block_bytes + 2 * weight_bytes + (2 << 20)
    vmem_limit = min(needed, 48 << 20) if needed > (16 << 20) else None

    return pl.pallas_call(
        _se_kernel,
        out_shape=jax.ShapeDtypeStruct((B, N, C), x.dtype),
        grid_spec=pltpu.PrefetchScalarGridSpec(
            num_scalar_prefetch=0,
            grid=(B // bt,),
            in_specs=[
                pl.BlockSpec((bt, N, C), lambda b: (b, 0, 0)),   # x  (per-group tile)
                pl.BlockSpec((C, H), lambda b: (0, 0)),          # W1 (resident across steps)
                pl.BlockSpec((1, H), lambda b: (0, 0)),          # b1
                pl.BlockSpec((H, C), lambda b: (0, 0)),          # W2
                pl.BlockSpec((1, C), lambda b: (0, 0)),          # b2
            ],
            out_specs=pl.BlockSpec((bt, N, C), lambda b: (b, 0, 0)),
        ),
        compiler_params=pltpu.CompilerParams(
            dimension_semantics=("parallel",),
            vmem_limit_bytes=vmem_limit,
        ),
    )(x, w1, b1, w2, b2)


def init_params(key, channel, reduction):
    """Deterministic synthetic init mimicking nn.Linear default (uniform +-1/sqrt(fan_in))."""
    hidden = channel // reduction
    k1, k2, k3, k4 = jax.random.split(key, 4)
    lim1 = 1.0 / jnp.sqrt(channel)
    lim2 = 1.0 / jnp.sqrt(hidden)
    w1 = jax.random.uniform(k1, (channel, hidden), jnp.float32, -lim1, lim1)
    b1 = jax.random.uniform(k2, (1, hidden), jnp.float32, -lim1, lim1)
    w2 = jax.random.uniform(k3, (hidden, channel), jnp.float32, -lim2, lim2)
    b2 = jax.random.uniform(k4, (1, channel), jnp.float32, -lim2, lim2)
    return w1, b1, w2, b2


def se_layer_ref(x, w1, b1, w2, b2):
    """Pure-JAX reference for verification."""
    xf = x.astype(jnp.float32)
    y = jnp.mean(xf, axis=1)                      # [B, C]
    h = jnp.maximum(y @ w1 + b1, 0.0)             # [B, H]
    g = jax.nn.sigmoid(h @ w2 + b2)               # [B, C]
    return (xf * g[:, None, :]).astype(x.dtype)


if __name__ == "__main__":
    # TODO(synk): real Minkowski batches are ragged (variable per-batch point counts);
    # this dense model assumes equal-sized batches, so the pooling divisor is N.
    B, N, C, reduction = 4, 64, 128, 16           # hidden = 8; C = 128 keeps stores lane-dense
    key = jax.random.PRNGKey(0)
    kx, kp = jax.random.split(key)
    x = jax.random.normal(kx, (B, N, C), jnp.float32)
    w1, b1, w2, b2 = init_params(kp, C, reduction)

    out = jax.block_until_ready(se_layer(x, w1, b1, w2, b2))
    ref = se_layer_ref(x, w1, b1, w2, b2)

    assert out.shape == (B, N, C)
    assert jnp.allclose(out, ref, atol=1e-5, rtol=1e-5), "mismatch vs reference"
    print("KERNEL_OK")
</pallas_src>

<mosaic_0001>
module attributes {stable_mosaic.version = 11 : i64} {
  func.func @_se_kernel(%arg0: i32, %arg1: memref<2x64x128xf32, #tpu.memory_space<vmem>>, %arg2: memref<128x8xf32, #tpu.memory_space<vmem>>, %arg3: memref<1x8xf32, #tpu.memory_space<vmem>>, %arg4: memref<8x128xf32, #tpu.memory_space<vmem>>, %arg5: memref<1x128xf32, #tpu.memory_space<vmem>>, %arg6: memref<2x64x128xf32, #tpu.memory_space<vmem>>) attributes {dimension_semantics = [#tpu.dimension_semantics<parallel>], iteration_bounds = array<i64: 2>, scalar_prefetch = 0 : i64, scratch_operands = 0 : i64, tpu.core_type = #tpu.core_type<tc>, window_params = [{transform_indices = @transform_0, window_bounds = array<i64: 2, 64, 128>}, {pipeline_mode = #tpu.pipeline_mode<synchronous>, transform_indices = @transform_1, window_bounds = array<i64: 128, 8>}, {pipeline_mode = #tpu.pipeline_mode<synchronous>, transform_indices = @transform_2, window_bounds = array<i64: 1, 8>}, {pipeline_mode = #tpu.pipeline_mode<synchronous>, transform_indices = @transform_3, window_bounds = array<i64: 8, 128>}, {pipeline_mode = #tpu.pipeline_mode<synchronous>, transform_indices = @transform_4, window_bounds = array<i64: 1, 128>}, {transform_indices = @transform_5, window_bounds = array<i64: 2, 64, 128>}]} {
    %c0 = arith.constant 0 : index
    %c0_0 = arith.constant 0 : index
    %c0_1 = arith.constant 0 : index
    %0 = vector.load %arg1[%c0, %c0_0, %c0_1] : memref<2x64x128xf32, #tpu.memory_space<vmem>>, vector<2x64x128xf32>
    %cst = arith.constant dense<0.000000e+00> : vector<2x128xf32>
    %1 = vector.multi_reduction <add>, %0, %cst [1] : vector<2x64x128xf32> to vector<2x128xf32>
    %cst_2 = arith.constant 1.562500e-02 : f32
    %2 = vector.broadcast %cst_2 : f32 to vector<2x128xf32>
    %3 = arith.mulf %1, %2 : vector<2x128xf32>
    %c0_3 = arith.constant 0 : index
    %c0_4 = arith.constant 0 : index
    %4 = vector.load %arg2[%c0_3, %c0_4] : memref<128x8xf32, #tpu.memory_space<vmem>>, vector<128x8xf32>
    %cst_5 = arith.constant dense<0.000000e+00> : vector<2x8xf32>
    %5 = tpu.matmul %3, %4, %cst_5 {dimension_numbers = #tpu.dot_dimension_numbers<[1], [0], [0], [1], [0, 0, 1, 1], [], []>} : vector<2x128xf32>, vector<128x8xf32>, vector<2x8xf32> -> vector<2x8xf32>
    %c0_6 = arith.constant 0 : index
    %c0_7 = arith.constant 0 : index
    %6 = vector.load %arg3[%c0_6, %c0_7] : memref<1x8xf32, #tpu.memory_space<vmem>>, vector<1x8xf32>
    %7 = vector.broadcast %6 : vector<1x8xf32> to vector<2x8xf32>
    %8 = arith.addf %5, %7 : vector<2x8xf32>
    %cst_8 = arith.constant 0.000000e+00 : f32
    %9 = vector.broadcast %cst_8 : f32 to vector<2x8xf32>
    %10 = arith.maximumf %8, %9 : vector<2x8xf32>
    %c0_9 = arith.constant 0 : index
    %c0_10 = arith.constant 0 : index
    %11 = vector.load %arg4[%c0_9, %c0_10] : memref<8x128xf32, #tpu.memory_space<vmem>>, vector<8x128xf32>
    %cst_11 = arith.constant dense<0.000000e+00> : vector<2x128xf32>
    %12 = tpu.matmul %10, %11, %cst_11 {dimension_numbers = #tpu.dot_dimension_numbers<[1], [0], [0], [1], [0, 0, 1, 1], [], []>} : vector<2x8xf32>, vector<8x128xf32>, vector<2x128xf32> -> vector<2x128xf32>
    %c0_12 = arith.constant 0 : index
    %c0_13 = arith.constant 0 : index
    %13 = vector.load %arg5[%c0_12, %c0_13] : memref<1x128xf32, #tpu.memory_space<vmem>>, vector<1x128xf32>
    %14 = vector.broadcast %13 : vector<1x128xf32> to vector<2x128xf32>
    %15 = arith.addf %12, %14 : vector<2x128xf32>
    %16 = arith.negf %15 : vector<2x128xf32>
    %17 = math.exp %16 : vector<2x128xf32>
    %cst_14 = arith.constant 1.000000e+00 : f32
    %18 = vector.broadcast %cst_14 : f32 to vector<2x128xf32>
    %19 = arith.addf %18, %17 : vector<2x128xf32>
    %20 = arith.divf %18, %19 : vector<2x128xf32>
    %21 = vector.shape_cast %20 : vector<2x128xf32> to vector<2x1x128xf32>
    %22 = vector.broadcast %21 : vector<2x1x128xf32> to vector<2x64x128xf32>
    %23 = arith.mulf %0, %22 : vector<2x64x128xf32>
    %c0_15 = arith.constant 0 : index
    %c0_16 = arith.constant 0 : index
    %c0_17 = arith.constant 0 : index
    %24 = vector.load %arg6[%c0_15, %c0_16, %c0_17] : memref<2x64x128xf32, #tpu.memory_space<vmem>>, vector<2x64x128xf32>
    tpu.vector_store %arg6[%c0_15, %c0_16, %c0_17], %23 {strides = array<i32>} : memref<2x64x128xf32, #tpu.memory_space<vmem>>, vector<2x64x128xf32>,
    return
  }
  func.func @transform_0(%arg0: i32) -> (i32, i32, i32) {
    %c0_i32 = arith.constant 0 : i32
    %c0_i32_0 = arith.constant 0 : i32
    %c0_i32_1 = arith.constant 0 : i32
    return %arg0, %c0_i32, %c0_i32_0 : i32, i32, i32
  }
  func.func @transform_1(%arg0: i32) -> (i32, i32) {
    %c0_i32 = arith.constant 0 : i32
    %c0_i32_0 = arith.constant 0 : i32
    %c0_i32_1 = arith.constant 0 : i32
    return %c0_i32, %c0_i32_0 : i32, i32
  }
  func.func @transform_2(%arg0: i32) -> (i32, i32) {
    %c0_i32 = arith.constant 0 : i32
    %c0_i32_0 = arith.constant 0 : i32
    %c0_i32_1 = arith.constant 0 : i32
    return %c0_i32, %c0_i32_0 : i32, i32
  }
  func.func @transform_3(%arg0: i32) -> (i32, i32) {
    %c0_i32 = arith.constant 0 : i32
    %c0_i32_0 = arith.constant 0 : i32
    %c0_i32_1 = arith.constant 0 : i32
    return %c0_i32, %c0_i32_0 : i32, i32
  }
  func.func @transform_4(%arg0: i32) -> (i32, i32) {
    %c0_i32 = arith.constant 0 : i32
    %c0_i32_0 = arith.constant 0 : i32
    %c0_i32_1 = arith.constant 0 : i32
    return %c0_i32, %c0_i32_0 : i32, i32
  }
  func.func @transform_5(%arg0: i32) -> (i32, i32, i32) {
    %c0_i32 = arith.constant 0 : i32
    %c0_i32_0 = arith.constant 0 : i32
    %c0_i32_1 = arith.constant 0 : i32
    return %arg0, %c0_i32, %c0_i32_0 : i32, i32, i32
  }
}

</mosaic_0001>

<llo_original>
// kernel: tpu_custom_call.1
$region0: #{tpu_custom_call.1}
  #allocation0 [shape = 'u32[]', space=smem, size = 0x4, offset = 0x4, fixed_abs, tag = 'smem constant byte address 0x4 - core index']
  #allocation1 [shape = 'u32[144,128]{1,0:T(1,128)}', space=vmem, size = 0x12000, scoped, tag = 'internal scratch']
  %s0 = inlined_call_operand.hbm [shape: f32[4,64,128], index: 0, kind: input, shape index: {}]
  %s1 = inlined_call_operand.vmem [shape: f32[128,8], index: 1, kind: input, shape index: {}]
  %s2 = inlined_call_operand.vmem [shape: f32[1,8], index: 2, kind: input, shape index: {}]
  %s3 = inlined_call_operand.vmem [shape: f32[8,128], index: 3, kind: input, shape index: {}]
  %s4 = inlined_call_operand.vmem [shape: f32[1,128], index: 4, kind: input, shape index: {}]
  %s5 = inlined_call_operand.hbm [shape: f32[4,64,128], index: 5, kind: output, shape index: {}]
  %s6 = sld [smem:[#allocation0]]
  $region57: #{tpu_custom_call.1} parent=0
    _
  %s8 = ssub.s32 1, %s6
  %s9 = scalar_select 0, %s8, %s6
  $region1: #{tpu_custom_call.1} parent=0
    #allocation2 [shape = 'u8[131072]{0}', space=vmem, size = 0x20000, scoped, tag = 'input window, operand 0']
    #allocation3 [shape = 's32[2]{0}', space=sflag, size = 0x8, scoped, tag = 'scoped memory for tpu_custom_call.1']
    #allocation4 [shape = 's32[2]{0}', space=sflag, size = 0x8, scoped, tag = 'scoped memory for tpu_custom_call.1']
    #allocation5 [shape = 'u8[131072]{0}', space=vmem, size = 0x20000, scoped, tag = 'output window, operand 0']
    %10 = vsyncpa [#allocation3], 0
    %s11 = scalar_lea.sflag [#allocation3], 1
    %12 = vsyncpa %s11, 0
    %13 = vsyncpa [#allocation4], 0
    %s14 = scalar_lea.sflag [#allocation4], 1
    %15 = vsyncpa %s14, 0
    loop: start=0, step=1, limit=4
    $region2: #{tpu_custom_call.1} parent=1 // loop_pre_header
      _
    $region3: #{tpu_custom_call.1} parent=1 // loop_header
      %s17 = sphi 0, %s21
      %p18 = scmp.ge.s32.totalorder %s17, 4
      %s27 = sphi 0, %s29
      %s30 = sphi 0, %s27
      %s31 = sphi 0, %s30
      %s47 = sphi 0, %s31
      %s51 = sphi 0, %s51
      %s53 = sphi 0, %s51
      %s54 = sphi 0, %s53
      %s68 = sphi 0, %s54
      %s72 = sphi 0, %s72
      %s74 = sphi 0, %s72
      %s75 = sphi 0, %s74
      %s89 = sphi 0, %s75
      %s93 = sphi 0, %s93
      %s95 = sphi 0, %s93
      %s96 = sphi 0, %s95
      %s110 = sphi 0, %s96
      %s114 = sphi 0, %s114
      %s116 = sphi 0, %s114
      %s117 = sphi 0, %s116
      %s131 = sphi 0, %s117
      %s137 = sphi 0, %s139
      %s140 = sphi 0, %s137
      %s141 = sphi 0, %s140
      %s157 = sphi 0, %s141
    $region4: #{tpu_custom_call.1} parent=1 // loop_header_branch
      %20 = sbr.rel (%p18) target = $region8
    $region5: #{tpu_custom_call.1} parent=1 // loop_body
      %s22 = ssub.s32 %s17, 1
      %s23 = ssub.s32 %s17, 2
      %s24 = sadd.s32 %s17, 1
      %s25 = ssub.s32 %s17, %s24
      %p26 = scmp.eq.s32.totalorder %s25, 0
      %s28 = sadd.s32 %s27, 1
      %s29 = scalar_select %p26, %s27, %s28
      %p32 = pneg %p26
      %p33 = scmp.eq.s32.totalorder %s17, 1
      %p34 = por %p32, %p33
      %p35 = scmp.ne.s32.totalorder %s27, %s30
      %p36 = scmp.eq.s32.totalorder %s17, 0
      %p37 = por %p35, %p36
      %p38 = scmp.ne.s32.totalorder %s27, %s30
      %p39 = scmp.eq.s32.totalorder %s22, 1
      %p40 = por %p38, %p39
      %p41 = scmp.ne.s32.totalorder %s30, %s31
      %p42 = scmp.eq.s32.totalorder %s22, 0
      %p43 = por %p41, %p42
      %p44 = scmp.ne.s32.totalorder %s30, %s31
      %p45 = scmp.eq.s32.totalorder %s23, 1
      %p46 = por %p44, %p45
      %p48 = scmp.ne.s32.totalorder %s31, %s47
      %p49 = scmp.eq.s32.totalorder %s23, 0
      %p50 = por %p48, %p49
      %s52 = sadd.s32 %s51, 1
      %p55 = scmp.eq.s32.totalorder %s17, 1
      %p56 = scmp.ne.s32.totalorder %s51, %s53
      %p57 = scmp.eq.s32.totalorder %s17, 0
      %p58 = por %p56, %p57
      %p59 = scmp.ne.s32.totalorder %s51, %s53
      %p60 = scmp.eq.s32.totalorder %s22, 1
      %p61 = por %p59, %p60
      %p62 = scmp.ne.s32.totalorder %s53, %s54
      %p63 = scmp.eq.s32.totalorder %s22, 0
      %p64 = por %p62, %p63
      %p65 = scmp.ne.s32.totalorder %s53, %s54
      %p66 = scmp.eq.s32.totalorder %s23, 1
      %p67 = por %p65, %p66
      %p69 = scmp.ne.s32.totalorder %s54, %s68
      %p70 = scmp.eq.s32.totalorder %s23, 0
      %p71 = por %p69, %p70
      %s73 = sadd.s32 %s72, 1
      %p76 = scmp.eq.s32.totalorder %s17, 1
      %p77 = scmp.ne.s32.totalorder %s72, %s74
      %p78 = scmp.eq.s32.totalorder %s17, 0
      %p79 = por %p77, %p78
      %p80 = scmp.ne.s32.totalorder %s72, %s74
      %p81 = scmp.eq.s32.totalorder %s22, 1
      %p82 = por %p80, %p81
      %p83 = scmp.ne.s32.totalorder %s74, %s75
      %p84 = scmp.eq.s32.totalorder %s22, 0
      %p85 = por %p83, %p84
      %p86 = scmp.ne.s32.totalorder %s74, %s75
      %p87 = scmp.eq.s32.totalorder %s23, 1
      %p88 = por %p86, %p87
      %p90 = scmp.ne.s32.totalorder %s75, %s89
      %p91 = scmp.eq.s32.totalorder %s23, 0
      %p92 = por %p90, %p91
      %s94 = sadd.s32 %s93, 1
      %p97 = scmp.eq.s32.totalorder %s17, 1
      %p98 = scmp.ne.s32.totalorder %s93, %s95
      %p99 = scmp.eq.s32.totalorder %s17, 0
      %p100 = por %p98, %p99
      %p101 = scmp.ne.s32.totalorder %s93, %s95
      %p102 = scmp.eq.s32.totalorder %s22, 1
      %p103 = por %p101, %p102
      %p104 = scmp.ne.s32.totalorder %s95, %s96
      %p105 = scmp.eq.s32.totalorder %s22, 0
      %p106 = por %p104, %p105
      %p107 = scmp.ne.s32.totalorder %s95, %s96
      %p108 = scmp.eq.s32.totalorder %s23, 1
      %p109 = por %p107, %p108
      %p111 = scmp.ne.s32.totalorder %s96, %s110
      %p112 = scmp.eq.s32.totalorder %s23, 0
      %p113 = por %p111, %p112
      %s115 = sadd.s32 %s114, 1
      %p118 = scmp.eq.s32.totalorder %s17, 1
      %p119 = scmp.ne.s32.totalorder %s114, %s116
      %p120 = scmp.eq.s32.totalorder %s17, 0
      %p121 = por %p119, %p120
      %p122 = scmp.ne.s32.totalorder %s114, %s116
      %p123 = scmp.eq.s32.totalorder %s22, 1
      %p124 = por %p122, %p123
      %p125 = scmp.ne.s32.totalorder %s116, %s117
      %p126 = scmp.eq.s32.totalorder %s22, 0
      %p127 = por %p125, %p126
      %p128 = scmp.ne.s32.totalorder %s116, %s117
      %p129 = scmp.eq.s32.totalorder %s23, 1
      %p130 = por %p128, %p129
      %p132 = scmp.ne.s32.totalorder %s117, %s131
      %p133 = scmp.eq.s32.totalorder %s23, 0
      %p134 = por %p132, %p133
      %s135 = ssub.s32 %s17, %s24
      %p136 = scmp.eq.s32.totalorder %s135, 0
      %s138 = sadd.s32 %s137, 1
      %s139 = scalar_select %p136, %s137, %s138
      %p142 = pneg %p136
      %p143 = scmp.eq.s32.totalorder %s17, 1
      %p144 = por %p142, %p143
      %p145 = scmp.ne.s32.totalorder %s137, %s140
      %p146 = scmp.eq.s32.totalorder %s17, 0
      %p147 = por %p145, %p146
      %p148 = scmp.ne.s32.totalorder %s137, %s140
      %p149 = scmp.eq.s32.totalorder %s22, 1
      %p150 = por %p148, %p149
      %p151 = scmp.ne.s32.totalorder %s140, %s141
      %p152 = scmp.eq.s32.totalorder %s22, 0
      %p153 = por %p151, %p152
      %p154 = scmp.ne.s32.totalorder %s140, %s141
      %p155 = scmp.eq.s32.totalorder %s23, 1
      %p156 = por %p154, %p155
      %p158 = scmp.ne.s32.totalorder %s141, %s157
      %p159 = scmp.eq.s32.totalorder %s23, 0
      %p160 = por %p158, %p159
      %p161 = scmp.le.s32.totalorder 1, %s17
      %p162 = scmp.lt.s32.totalorder %s17, 3
      %p163 = pnand %p161, %p162
      %p164 = pneg %p163
      // Predicated region
      $region9: #{tpu_custom_call.1} parent=5 // pred_check
        _
      $region10: #{tpu_custom_call.1} parent=5 // pred_check_branch
        %166 = sbr.rel (%p163) target = $region12
      $region11: #{tpu_custom_call.1} parent=5 // pred_region
        %s167 = ssub.s32 %s17, 1
        // Predicated region
        $region13: #{tpu_custom_call.1} parent=11 // pred_check
          %p168 = pneg %p64
        $region14: #{tpu_custom_call.1} parent=11 // pred_check_branch
          %170 = sbr.rel (%p168) target = $region16
        $region15: #{tpu_custom_call.1} parent=11 // pred_region
          _
        $region16: #{tpu_custom_call.1} parent=11 // pred_fallthru
          _
        // Predicated region
        $region17: #{tpu_custom_call.1} parent=11 // pred_check
          %p171 = pneg %p85
        $region18: #{tpu_custom_call.1} parent=11 // pred_check_branch
          %173 = sbr.rel (%p171) target = $region20
        $region19: #{tpu_custom_call.1} parent=11 // pred_region
          _
        $region20: #{tpu_custom_call.1} parent=11 // pred_fallthru
          _
        // Predicated region
        $region21: #{tpu_custom_call.1} parent=11 // pred_check
          %p174 = pneg %p106
        $region22: #{tpu_custom_call.1} parent=11 // pred_check_branch
          %176 = sbr.rel (%p174) target = $region24
        $region23: #{tpu_custom_call.1} parent=11 // pred_region
          _
        $region24: #{tpu_custom_call.1} parent=11 // pred_fallthru
          _
        // Predicated region
        $region25: #{tpu_custom_call.1} parent=11 // pred_check
          %p177 = pneg %p127
        $region26: #{tpu_custom_call.1} parent=11 // pred_check_branch
          %179 = sbr.rel (%p177) target = $region28
        $region27: #{tpu_custom_call.1} parent=11 // pred_region
          _
        $region28: #{tpu_custom_call.1} parent=11 // pred_fallthru
          _
      $region12: #{tpu_custom_call.1} parent=5 // pred_fallthru
        _
      %p180 = scmp.lt.s32.totalorder %s17, 2
      // Predicated region
      $region29: #{tpu_custom_call.1} parent=5 // pred_check
        %p181 = pneg %p180
      $region30: #{tpu_custom_call.1} parent=5 // pred_check_branch
        %183 = sbr.rel (%p181) target = $region32
      $region31: #{tpu_custom_call.1} parent=5 // pred_region
        // Predicated region
        $region33: #{tpu_custom_call.1} parent=31 // pred_check
          %p184 = pneg %p37
        $region34: #{tpu_custom_call.1} parent=31 // pred_check_branch
          %186 = sbr.rel (%p184) target = $region36
        $region35: #{tpu_custom_call.1} parent=31 // pred_region
          %s187 = sand.u32 %s27, 1
          %s188 = scalar_lea.sflag [#allocation3], %s187
          %s189 = sand.u32 %s27, 1
          %s190 = smul.addr %s189, 128
          %s191 = scalar_lea.vmem [#allocation2], %s190
          %s192 = smul.u32 2, %s17
          %s194 = ssub.s32 2048, 2048
          %195 = vsyncadd %s188, %s194
          %s196 = smul.addr %s192, 8
          %s197 = smul.addr %s196, 128
          %s198 = scalar_lea.hbm %s0, %s197
          %s199 = sshll.u32 %s191, 4
          %s200 = int_to_ptr.vmem [resolvable:$true] %s199
          %205 = dma.hbm_to_vmem [thread:$0]  %s198, 2048, %s200, %s188, 128, 128, 8
        $region36: #{tpu_custom_call.1} parent=31 // pred_fallthru
          _
      $region32: #{tpu_custom_call.1} parent=5 // pred_fallthru
        _
      %p206 = scmp.le.s32.totalorder 1, %s17
      %p207 = scmp.lt.s32.totalorder %s17, 3
      %p208 = pnand %p206, %p207
      %p209 = pneg %p208
      // Predicated region
      $region37: #{tpu_custom_call.1} parent=5 // pred_check
        _
      $region38: #{tpu_custom_call.1} parent=5 // pred_check_branch
        %211 = sbr.rel (%p208) target = $region40
      $region39: #{tpu_custom_call.1} parent=5 // pred_region
        %s212 = ssub.s32 %s17, 1
        %s213 = sand.u32 %s30, 1
        %s214 = scalar_lea.sflag [#allocation3], %s213
        %s215 = sand.u32 %s30, 1
        %s216 = smul.addr %s215, 128
        %s217 = scalar_lea.vmem [#allocation2], %s216
        // Predicated region
        $region41: #{tpu_custom_call.1} parent=39 // pred_check
          %p218 = pneg %p43
        $region42: #{tpu_custom_call.1} parent=39 // pred_check_branch
          %220 = sbr.rel (%p218) target = $region44
        $region43: #{tpu_custom_call.1} parent=39 // pred_region
          %221 = dma.done %s214, 2048
        $region44: #{tpu_custom_call.1} parent=39 // pred_fallthru
          _
        %s222 = sand.u32 %s30, 1
        %s223 = scalar_lea.sflag [#allocation3], %s222
        %s224 = sand.u32 %s30, 1
        %s225 = smul.addr %s224, 128
        %s226 = scalar_lea.vmem [#allocation2], %s225
        %p227 = pneg %p43
        %p228 = pneg %p40
        %p229 = pneg %p64
        %p230 = pneg %p61
        %p231 = pneg %p85
        %p232 = pneg %p82
        %p233 = pneg %p106
        %p234 = pneg %p103
        %p235 = pneg %p127
        %p236 = pneg %p124
        %p237 = pneg %p153
        %p238 = pneg %p150
        %s239 = sand.u32 %s140, 1
        %s240 = scalar_lea.sflag [#allocation4], %s239
        %s241 = sand.u32 %s140, 1
        %s242 = smul.addr %s241, 128
        %s243 = scalar_lea.vmem [#allocation5], %s242
        %s244 = smul.u32 2, %s22
        %s245 = smul.u32 2, %s22
        %v246 = vld [vmem:[%s217] sm:$0xff]
        %v247 = vld [vmem:[%s217 + $0x8] sm:$0xff]
        %v248 = vld [vmem:[%s217 + $0x10] sm:$0xff]
        %v249 = vld [vmem:[%s217 + $0x18] sm:$0xff]
        %v250 = vld [vmem:[%s217 + $0x20] sm:$0xff]
        %v251 = vld [vmem:[%s217 + $0x28] sm:$0xff]
        %v252 = vld [vmem:[%s217 + $0x30] sm:$0xff]
        %v253 = vld [vmem:[%s217 + $0x38] sm:$0xff]
        %v254 = vld [vmem:[%s217 + $0x40] sm:$0xff]
        %v255 = vld [vmem:[%s217 + $0x48] sm:$0xff]
        %v256 = vld [vmem:[%s217 + $0x50] sm:$0xff]
        %v257 = vld [vmem:[%s217 + $0x58] sm:$0xff]
        %v258 = vld [vmem:[%s217 + $0x60] sm:$0xff]
        %v259 = vld [vmem:[%s217 + $0x68] sm:$0xff]
        %v260 = vld [vmem:[%s217 + $0x70] sm:$0xff]
        %v261 = vld [vmem:[%s217 + $0x78] sm:$0xff]
        %v262 = vadd.f32 %v246, %v247
        %v263 = vadd.f32 %v262, %v248
        %v264 = vadd.f32 %v263, %v249
        %v265 = vadd.f32 %v264, %v250
        %v266 = vadd.f32 %v265, %v251
        %v267 = vadd.f32 %v266, %v252
        %v268 = vadd.f32 %v267, %v253
        %v269 = vrot.slane %v268, 4
        %v270 = vadd.f32 %v268, %v269
        %v271 = vrot.slane %v270, 2
        %v272 = vadd.f32 %v270, %v271
        %v273 = vrot.slane %v272, 1
        %v274 = vadd.f32 %v272, %v273
        %v275 = vadd.f32 %v254, %v255
        %v276 = vadd.f32 %v275, %v256
        %v277 = vadd.f32 %v276, %v257
        %v278 = vadd.f32 %v277, %v258
        %v279 = vadd.f32 %v278, %v259
        %v280 = vadd.f32 %v279, %v260
        %v281 = vadd.f32 %v280, %v261
        %v282 = vrot.slane %v281, 4
        %v283 = vadd.f32 %v281, %v282
        %v284 = vrot.slane %v283, 2
        %v285 = vadd.f32 %v283, %v284
        %v286 = vrot.slane %v285, 1
        %v287 = vadd.f32 %v285, %v286
        %v288 = vmul.f32 %v274, 0.015625
        %v289 = vmul.f32 %v287, 0.015625
        %v290 = vld [vmem:[%s1] sm:$0xff]
        %v291 = vld [vmem:[%s1 + $0x8] sm:$0xff]
        %v292 = vld [vmem:[%s1 + $0x10] sm:$0xff]
        %v293 = vld [vmem:[%s1 + $0x18] sm:$0xff]
        %v294 = vld [vmem:[%s1 + $0x20] sm:$0xff]
        %v295 = vld [vmem:[%s1 + $0x28] sm:$0xff]
        %v296 = vld [vmem:[%s1 + $0x30] sm:$0xff]
        %v297 = vld [vmem:[%s1 + $0x38] sm:$0xff]
        %v298 = vld [vmem:[%s1 + $0x40] sm:$0xff]
        %v299 = vld [vmem:[%s1 + $0x48] sm:$0xff]
        %v300 = vld [vmem:[%s1 + $0x50] sm:$0xff]
        %v301 = vld [vmem:[%s1 + $0x58] sm:$0xff]
        %v302 = vld [vmem:[%s1 + $0x60] sm:$0xff]
        %v303 = vld [vmem:[%s1 + $0x68] sm:$0xff]
        %v304 = vld [vmem:[%s1 + $0x70] sm:$0xff]
        %v305 = vld [vmem:[%s1 + $0x78] sm:$0xff]
        %v306 = vld [vmem:[%s2] sm:$0x1]
        %v308 = vlaneseq
        %v309 = vshrl.u32 %v308, 7
        %v310 = vsub.s32 0, %v309
        %v311 = vrot.slane %v306, %v310
        %vm315 = vcmask 1041409
        %v316 = vsel %vm315, %v289, %v288
        %318 = vmatprep.subr.mxu0 0.0
        %319 = vmatpush1.msra.mxu0 %v305
        %320 = vmatprep.subr.mxu0 0.0
        %321 = vmatpush1.msra.mxu0 %v304
        %322 = vmatprep.subr.mxu0 0.0
        %323 = vmatpush1.msra.mxu0 %v303
        %324 = vmatprep.subr.mxu0 0.0
        %325 = vmatpush1.msra.mxu0 %v302
        %326 = vmatprep.subr.mxu0 0.0
        %327 = vmatpush1.msra.mxu0 %v301
        %328 = vmatprep.subr.mxu0 0.0
        %329 = vmatpush1.msra.mxu0 %v300
        %330 = vmatprep.subr.mxu0 0.0
        %331 = vmatpush1.msra.mxu0 %v299
        %332 = vmatprep.subr.mxu0 0.0
        %333 = vmatpush1.msra.mxu0 %v298
        %334 = vmatprep.subr.mxu0 0.0
        %335 = vmatpush1.msra.mxu0 %v297
        %336 = vmatprep.subr.mxu0 0.0
        %337 = vmatpush1.msra.mxu0 %v296
        %338 = vmatprep.subr.mxu0 0.0
        %339 = vmatpush1.msra.mxu0 %v295
        %340 = vmatprep.subr.mxu0 0.0
        %341 = vmatpush1.msra.mxu0 %v294
        %342 = vmatprep.subr.mxu0 0.0
        %343 = vmatpush1.msra.mxu0 %v293
        %344 = vmatprep.subr.mxu0 0.0
        %345 = vmatpush1.msra.mxu0 %v292
        %346 = vmatprep.subr.mxu0 0.0
        %347 = vmatpush1.msra.mxu0 %v291
        %348 = vmatprep.subr.mxu0 0.0
        %349 = vmatpush1.msra.mxu0 %v290
        %350 = vmatprep.subr.mxu0 0.0
        %351 = vmatpush2.msra.mxu0 0.0
        %352 = vmatprep.subr.mxu0 0.0
        %353 = vmatpush2.msra.mxu0 0.0
        %354 = vmatprep.subr.mxu0 0.0
        %355 = vmatpush2.msra.mxu0 0.0
        %356 = vmatprep.subr.mxu0 0.0
        %357 = vmatpush2.msra.mxu0 0.0
        %358 = vmatprep.subr.mxu0 0.0
        %359 = vmatpush2.msra.mxu0 0.0
        %360 = vmatprep.subr.mxu0 0.0
        %361 = vmatpush2.msra.mxu0 0.0
        %362 = vmatprep.subr.mxu0 0.0
        %363 = vmatpush2.msra.mxu0 0.0
        %364 = vmatprep.subr.mxu0 0.0
        %365 = vmatpush2.msra.mxu0 0.0
        %366 = vmatprep.subr.mxu0 0.0
        %367 = vmatpush2.msra.mxu0 0.0
        %368 = vmatprep.subr.mxu0 0.0
        %369 = vmatpush2.msra.mxu0 0.0
        %370 = vmatprep.subr.mxu0 0.0
        %371 = vmatpush2.msra.mxu0 0.0
        %372 = vmatprep.subr.mxu0 0.0
        %373 = vmatpush2.msra.mxu0 0.0
        %374 = vmatprep.subr.mxu0 0.0
        %375 = vmatpush2.msra.mxu0 0.0
        %376 = vmatprep.subr.mxu0 0.0
        %377 = vmatpush2.msra.mxu0 0.0
        %378 = vmatprep.subr.mxu0 0.0
        %379 = vmatpush2.msra.mxu0 0.0
        %380 = vmatprep.subr.mxu0 0.0
        %381 = vmatpush2.msra.mxu0 0.0
        %382 = vmatprep.mubr.f32.mxu0 0.0
        %383 = vmatmul.mubr.f32.gmra.mxu0 %v316
        %v384 = vpop.f32.mrf.mxu0
        %v385 = vadd.f32 %v311, %v384
        %v386 = vpop.f32.mrf.mxu0
        %387 = vdwg.mxu0
        %v388 = vmax.f32 %v385, 0.0
        %v389 = vld [vmem:[%s3] sm:$0xff]
        %v390 = vld [vmem:[%s4] sm:$0x1]
        %v392 = vlaneseq
        %v393 = vshrl.u32 %v392, 7
        %v394 = vsub.s32 0, %v393
        %v395 = vrot.slane %v390, %v394
        %vm397 = vcmask 64512
        %v399 = vsel %vm397, %v388, 0
        %401 = vmatprep.subr.mxu0 0.0
        %402 = vmatpush1.msra.mxu0 0.0
        %403 = vmatprep.subr.mxu0 0.0
        %404 = vmatpush1.msra.mxu0 0.0
        %405 = vmatprep.subr.mxu0 0.0
        %406 = vmatpush1.msra.mxu0 0.0
        %407 = vmatprep.subr.mxu0 0.0
        %408 = vmatpush1.msra.mxu0 0.0
        %409 = vmatprep.subr.mxu0 0.0
        %410 = vmatpush1.msra.mxu0 0.0
        %411 = vmatprep.subr.mxu0 0.0
        %412 = vmatpush1.msra.mxu0 0.0
        %413 = vmatprep.subr.mxu0 0.0
        %414 = vmatpush1.msra.mxu0 0.0
        %415 = vmatprep.subr.mxu0 0.0
        %416 = vmatpush1.msra.mxu0 0.0
        %417 = vmatprep.subr.mxu0 0.0
        %418 = vmatpush1.msra.mxu0 0.0
        %419 = vmatprep.subr.mxu0 0.0
        %420 = vmatpush1.msra.mxu0 0.0
        %421 = vmatprep.subr.mxu0 0.0
        %422 = vmatpush1.msra.mxu0 0.0
        %423 = vmatprep.subr.mxu0 0.0
        %424 = vmatpush1.msra.mxu0 0.0
        %425 = vmatprep.subr.mxu0 0.0
        %426 = vmatpush1.msra.mxu0 0.0
        %427 = vmatprep.subr.mxu0 0.0
        %428 = vmatpush1.msra.mxu0 0.0
        %429 = vmatprep.subr.mxu0 0.0
        %430 = vmatpush1.msra.mxu0 0.0
        %431 = vmatprep.subr.mxu0 0.0
        %432 = vmatpush1.msra.mxu0 %v389
        %433 = vmatprep.subr.mxu0 0.0
        %434 = vmatpush2.msra.mxu0 0.0
        %435 = vmatprep.subr.mxu0 0.0
        %436 = vmatpush2.msra.mxu0 0.0
        %437 = vmatprep.subr.mxu0 0.0
        %438 = vmatpush2.msra.mxu0 0.0
        %439 = vmatprep.subr.mxu0 0.0
        %440 = vmatpush2.msra.mxu0 0.0
        %441 = vmatprep.subr.mxu0 0.0
        %442 = vmatpush2.msra.mxu0 0.0
        %443 = vmatprep.subr.mxu0 0.0
        %444 = vmatpush2.msra.mxu0 0.0
        %445 = vmatprep.subr.mxu0 0.0
        %446 = vmatpush2.msra.mxu0 0.0
        %447 = vmatprep.subr.mxu0 0.0
        %448 = vmatpush2.msra.mxu0 0.0
        %449 = vmatprep.subr.mxu0 0.0
        %450 = vmatpush2.msra.mxu0 0.0
        %451 = vmatprep.subr.mxu0 0.0
        %452 = vmatpush2.msra.mxu0 0.0
        %453 = vmatprep.subr.mxu0 0.0
        %454 = vmatpush2.msra.mxu0 0.0
        %455 = vmatprep.subr.mxu0 0.0
        %456 = vmatpush2.msra.mxu0 0.0
        %457 = vmatprep.subr.mxu0 0.0
        %458 = vmatpush2.msra.mxu0 0.0
        %459 = vmatprep.subr.mxu0 0.0
        %460 = vmatpush2.msra.mxu0 0.0
        %461 = vmatprep.subr.mxu0 0.0
        %462 = vmatpush2.msra.mxu0 0.0
        %463 = vmatprep.subr.mxu0 0.0
        %464 = vmatpush2.msra.mxu0 0.0
        %465 = vmatprep.mubr.f32.mxu0 0.0
        %466 = vmatmul.mubr.f32.gmra.mxu0 %v399
        %v467 = vpop.f32.mrf.mxu0
        %v468 = vadd.f32 %v395, %v467
        %v469 = vpop.f32.mrf.mxu0
        %470 = vdwg.mxu0
        %v471 = vxor.u32 %v468, 2147483648
        %v472 = vmul.f32 %v471, 1.442695
        %v473 = vpow.pop %v472
        %v474 = vadd.f32 %v473, 1.0
        %v475 = vrcp.pop %v474
        %v476 = vmul.f32 1.0, %v475
        %v479 = vunpack.c.l.s4 1966171168
        %v480 = vunpack.c.0.s8 %v479
        %v481 = vlaneseq
        %v482 = vshrl.u32 %v481, 7
        %v483 = vsub.s32 %v480, %v482
        %v484 = vrot.slane %v476, %v483
        %v485 = vcombine.high %v484, %v484
        %v487 = vunpack.c.l.s4 1966171168
        %v488 = vunpack.c.0.s8 %v487
        %v489 = vlaneseq
        %v490 = vshrl.u32 %v489, 7
        %v491 = vsub.s32 %v488, %v490
        %v492 = vrot.slane %v484, %v491
        %v494 = vunpack.c.l.s4 1966171168
        %v495 = vunpack.c.0.s8 %v494
        %v496 = vlaneseq
        %v497 = vshrl.u32 %v496, 7
        %v498 = vsub.s32 %v495, %v497
        %v499 = vrot.slane %v485, %v498
        %v500 = vlaneseq
        %v501 = vshrl.u32 %v500, 7
        %v502 = vsub.s32 0, %v501
        %v503 = vrot.slane %v492, %v502
        %v504 = vlaneseq
        %v505 = vshrl.u32 %v504, 7
        %v506 = vsub.s32 0, %v505
        %v507 = vrot.slane %v499, %v506
        %v510 = vmul.f32 %v246, %v503
        %v511 = vmul.f32 %v247, %v503
        %v512 = vmul.f32 %v248, %v503
        %v513 = vmul.f32 %v249, %v503
        %v514 = vmul.f32 %v250, %v503
        %v515 = vmul.f32 %v251, %v503
        %v516 = vmul.f32 %v252, %v503
        %v517 = vmul.f32 %v253, %v503
        %v518 = vmul.f32 %v254, %v507
        %v519 = vmul.f32 %v255, %v507
        %v520 = vmul.f32 %v256, %v507
        %v521 = vmul.f32 %v257, %v507
        %v522 = vmul.f32 %v258, %v507
        %v523 = vmul.f32 %v259, %v507
        %v524 = vmul.f32 %v260, %v507
        %v525 = vmul.f32 %v261, %v507
        %526 = vst [vmem:[%s243] sm:$0xff] %v510
        %527 = vst [vmem:[%s243 + $0x8] sm:$0xff] %v511
        %528 = vst [vmem:[%s243 + $0x10] sm:$0xff] %v512
        %529 = vst [vmem:[%s243 + $0x18] sm:$0xff] %v513
        %530 = vst [vmem:[%s243 + $0x20] sm:$0xff] %v514
        %531 = vst [vmem:[%s243 + $0x28] sm:$0xff] %v515
        %532 = vst [vmem:[%s243 + $0x30] sm:$0xff] %v516
        %533 = vst [vmem:[%s243 + $0x38] sm:$0xff] %v517
        %534 = vst [vmem:[%s243 + $0x40] sm:$0xff] %v518
        %535 = vst [vmem:[%s243 + $0x48] sm:$0xff] %v519
        %536 = vst [vmem:[%s243 + $0x50] sm:$0xff] %v520
        %537 = vst [vmem:[%s243 + $0x58] sm:$0xff] %v521
        %538 = vst [vmem:[%s243 + $0x60] sm:$0xff] %v522
        %539 = vst [vmem:[%s243 + $0x68] sm:$0xff] %v523
        %540 = vst [vmem:[%s243 + $0x70] sm:$0xff] %v524
        %541 = vst [vmem:[%s243 + $0x78] sm:$0xff] %v525
        %s542 = sand.u32 %s140, 1
        %s543 = scalar_lea.sflag [#allocation4], %s542
        %s544 = sand.u32 %s140, 1
        %s545 = smul.addr %s544, 128
        %s546 = scalar_lea.vmem [#allocation5], %s545
        // Predicated region
        $region45: #{tpu_custom_call.1} parent=39 // pred_check
          %p547 = pneg %p150
        $region46: #{tpu_custom_call.1} parent=39 // pred_check_branch
          %549 = sbr.rel (%p547) target = $region48
        $region47: #{tpu_custom_call.1} parent=39 // pred_region
          %s550 = smul.u32 2, %s22
          %s552 = ssub.s32 2048, 2048
          %553 = vsyncadd %s543, %s552
          %s554 = smul.addr %s550, 8
          %s555 = smul.addr %s554, 128
          %s556 = scalar_lea.hbm %s5, %s555
          %s557 = sshll.u32 %s546, 4
          %s558 = int_to_ptr.vmem [resolvable:$true] %s557
          %563 = dma.vmem_to_hbm [thread:$0]  %s558, 2048, %s556, %s543, 128, 128, 8
        $region48: #{tpu_custom_call.1} parent=39 // pred_fallthru
          _
      $region40: #{tpu_custom_call.1} parent=5 // pred_fallthru
        _
      %p564 = scmp.le.s32.totalorder 2, %s17
      // Predicated region
      $region49: #{tpu_custom_call.1} parent=5 // pred_check
        %p565 = pneg %p564
      $region50: #{tpu_custom_call.1} parent=5 // pred_check_branch
        %567 = sbr.rel (%p565) target = $region52
      $region51: #{tpu_custom_call.1} parent=5 // pred_region
        %s568 = ssub.s32 %s17, 2
        // Predicated region
        $region53: #{tpu_custom_call.1} parent=51 // pred_check
          %p569 = pneg %p156
        $region54: #{tpu_custom_call.1} parent=51 // pred_check_branch
          %571 = sbr.rel (%p569) target = $region56
        $region55: #{tpu_custom_call.1} parent=51 // pred_region
          %s572 = sand.u32 %s141, 1
          %s573 = scalar_lea.sflag [#allocation4], %s572
          %s574 = sand.u32 %s141, 1
          %s575 = smul.addr %s574, 128
          %s576 = scalar_lea.vmem [#allocation5], %s575
          %577 = dma.done %s573, 2048
        $region56: #{tpu_custom_call.1} parent=51 // pred_fallthru
          _
      $region52: #{tpu_custom_call.1} parent=5 // pred_fallthru
        _
    $region6: #{tpu_custom_call.1} parent=1 // loop_footer
      %s21 = sadd.s32 1, %s17
    $region7: #{tpu_custom_call.1} parent=1 // loop_footer_branch
      %16 = sbr.rel target = $region3
    $region8: #{tpu_custom_call.1} parent=1 // loop_exit
      _
    %578 = vsyncpa [#allocation3], 1
    %s579 = scalar_lea.sflag [#allocation3], 1
    %580 = vsyncpa %s579, 1
    %581 = vsyncpa [#allocation4], 1
    %s582 = scalar_lea.sflag [#allocation4], 1
    %583 = vsyncpa %s582, 1

</llo_original>
